<compile_context>
chip_gen: v7x
topology: tpu7x:2x2x1
jax: 0.10.0
libtpu: 0.0.40
codegen_flags: <defaults>
</compile_context>

<pallas_src>
import jax
import jax.numpy as jnp
from jax.experimental import pallas as pl
from jax.experimental.pallas import tpu as pltpu


def _round_up(x, m):
    return (x + m - 1) // m * m


def _cdiv(a, b):
    return -(-a // b)


# ----------------------------------------------------------------------------
# Kernel: one (node-tile, batch-item) grid step.
#   g_ref : (S, tm, Vp)  bf16  fused Pool+spiral-gather selection rows (tile)
#   x_ref : (1, Vp, C)   bf16  one batch item's input node features
#   w_ref : (S, C, Op)   bf16  Linear weight, split per spiral position
#   b_ref : (1, Op)      f32   bias (lane-padded)
#   o_ref : (1, tm, Op)  f32   output tile
# ----------------------------------------------------------------------------
def _spiral_deblock_kernel(g_ref, x_ref, w_ref, b_ref, o_ref):
    S = g_ref.shape[0]
    xb = x_ref[0]                                          # (Vp, C) bf16
    acc = jnp.zeros(o_ref.shape[1:], jnp.float32)          # (tm, Op) f32

    for s in range(S):                                     # static unroll over spiral
        # Pool + spiral gather for position s as a dense MXU matmul:
        #   g[n, :] = pooled[b, indices[n, s], :]
        g = jnp.dot(g_ref[s], xb, preferred_element_type=jnp.float32)      # (tm, C)
        # Linear contribution of spiral position s.
        acc += jnp.dot(g.astype(jnp.bfloat16), w_ref[s],
                       preferred_element_type=jnp.float32)                  # (tm, Op)

    acc = acc + b_ref[...]                                  # f32 epilogue
    o_ref[0] = jnp.maximum(acc, 0.0).astype(o_ref.dtype)    # fused ReLU


def _vmem_limit_bytes(needed_bytes):
    """Chip-aware scoped-VMEM limit (64 MiB core on v7x, 128 MiB on v5e/v6e)."""
    cap = 64 * 1024 * 1024                                  # conservative fallback
    try:
        cap = int(pltpu.get_tpu_info().vmem_capacity_bytes)
    except Exception:                                       # API drift safety
        pass
    limit = max(int(needed_bytes) + (4 << 20), 32 << 20)
    return int(min(limit, int(cap * 0.9)))


def pool(x, up_row, up_col, up_val, up_size):
    """Reference torch Pool: scatter_add(index_select(x, 1, col) * val, row).

    Only used for correctness checking; the fused fast path densifies the
    up_transform and runs it on the MXU inside the Pallas kernel instead.
    """
    gathered = jnp.take(x, up_col, axis=1) * up_val[None, :, None]
    out = jnp.zeros((x.shape[0], up_size, x.shape[2]), x.dtype)
    return out.at[:, up_row, :].add(gathered)


def spiral_deblock(x, up_row, up_col, up_val, up_size, indices, weight_t, bias,
                   *, tm=256, lane_align=128):
    """SpiralDeblock.forward: relu(SpiralConv(Pool(x, up_transform))).

    x:         (B, V_in, C) f32  node features of the coarse mesh
    up_row/col/val: COO of the sparse up_transform, shape (V_up, V_in)
    up_size:   V_up (number of upsampled nodes == n_nodes of `indices`)
    indices:   (N, S) i32   spiral neighbourhoods into the upsampled mesh
    weight_t:  (S*C, O) f32 Linear weight transposed (x @ W^T layout)
    bias:      (O,)     f32
    tm:        node tile (rounded to a multiple of 16)
    lane_align: 128 is safe on all chips; on v6e/v7x with O >= 129, 256 feeds
                the full 256-wide MXU.
    """
    B, V_in, C = x.shape
    N, S = indices.shape
    K = S * C
    O = weight_t.shape[1]
    assert weight_t.shape[0] == K, "weight_t must be (S*C, O)"

    f32, bf16 = jnp.float32, jnp.bfloat16

    # --- densify the up_transform and fold the spiral gather into it -------
    # TODO(synk): the COO->dense build + row gather stays in plain JAX (tiny,
    # batch-independent, done once); everything batch-dependent runs in-kernel.
    U = jnp.zeros((up_size, V_in), f32).at[up_row, up_col].add(up_val)
    G = jnp.take(U.astype(bf16), indices.astype(jnp.int32), axis=0)  # (N, S, V_in)
    G = jnp.transpose(G, (1, 0, 2))                                  # (S, N, V_in)

    # --- tiling / padding ---------------------------------------------------
    Vp = _round_up(V_in, 8)                      # sublane-aligned contraction dim
    Op = _round_up(O, lane_align)                # lane-dense output stream

    nt = max(1, _cdiv(N, tm))
    if B == 1 and nt == 1 and N > 16:
        nt = 2                                   # >= 2 grid steps for 2 v7x TCs
    tm_eff = min(tm, _round_up(_cdiv(N, nt), 16))  # bf16-dense node tile
    Np = nt * tm_eff

    G = jnp.pad(G, ((0, 0), (0, Np - N), (0, Vp - V_in)))
    xp = jnp.pad(x.astype(bf16), ((0, 0), (0, Vp - V_in), (0, 0)))   # (B, Vp, C)
    W = jnp.pad(weight_t.astype(bf16).reshape(S, C, O),
                ((0, 0), (0, 0), (0, Op - O)))                       # (S, C, Op)
    bp = jnp.pad(bias.astype(f32).reshape(1, O), ((0, 0), (0, Op - O)))

    # --- VMEM budget (double-buffered streams + resident params) -----------
    vmem_needed = (2 * S * tm_eff * Vp * 2       # G tile, bf16, 2 buffers
                   + 2 * Vp * C * 2              # x block, bf16, 2 buffers
                   + 2 * S * C * Op * 2          # weight (charged conservatively)
                   + 2 * Op * 4                  # bias
                   + 2 * tm_eff * Op * 4         # out tile, f32, 2 buffers
                   + tm_eff * Op * 4 + tm_eff * C * 4)  # acc / g temporaries

    out = pl.pallas_call(
        _spiral_deblock_kernel,
        out_shape=jax.ShapeDtypeStruct((B, Np, Op), f32),
        grid=(nt, B),                            # node-tiles outer, batch inner
        in_specs=[
            pl.BlockSpec((S, tm_eff, Vp), lambda j, b: (0, j, 0)),   # G tile
            pl.BlockSpec((1, Vp, C),      lambda j, b: (b, 0, 0)),   # x[b]
            pl.BlockSpec((S, C, Op),      lambda j, b: (0, 0, 0)),   # W resident
            pl.BlockSpec((1, Op),         lambda j, b: (0, 0)),      # bias resident
        ],
        out_specs=pl.BlockSpec((1, tm_eff, Op), lambda j, b: (b, j, 0)),
        compiler_params=pltpu.CompilerParams(
            dimension_semantics=("parallel", "parallel"),
            vmem_limit_bytes=_vmem_limit_bytes(vmem_needed),
        ),
        cost_estimate=pl.CostEstimate(
            flops=2 * B * Np * S * (Vp * C + C * Op),
            transcendentals=0,
            bytes_accessed=(S * Np * Vp * 2          # G read
                            + B * nt * Vp * C * 2    # x reads
                            + S * C * Op * 2         # weight
                            + B * Np * Op * 4),      # output write
        ),
    )(G, xp, W, bp)

    return out[:, :N, :O]


if __name__ == "__main__":
    # Small shapes consistent with the module.
    B = 2          # batch
    V_in = 12      # coarse-mesh vertices (input to Pool)
    V_up = 16      # upsampled vertices == n_nodes of the spiral indices
    C = 8          # in_channels
    S = 4          # spiral seq_length
    O = 32         # out_channels
    N = V_up
    K = S * C

    key = jax.random.PRNGKey(0)
    kx, ki, kw, kc, kv = jax.random.split(key, 5)

    x = jax.random.normal(kx, (B, V_in, C), dtype=jnp.float32)

    # Sparse up_transform (V_up, V_in) in COO form: 2 nonzeros per output row.
    nnz_per_row = 2
    up_row = jnp.repeat(jnp.arange(V_up, dtype=jnp.int32), nnz_per_row)
    up_col = jax.random.randint(kc, (V_up * nnz_per_row,), 0, V_in, dtype=jnp.int32)
    up_val = jax.random.uniform(kv, (V_up * nnz_per_row,), dtype=jnp.float32)

    # Spiral indices (n_nodes, seq_length) into the upsampled mesh.
    indices = jax.random.randint(ki, (N, S), 0, V_up, dtype=jnp.int32)

    # Deterministic params mirroring reset_parameters():
    #   xavier_uniform_ on weight (O, K) -> bound = sqrt(6 / (K + O)); zero bias.
    bound = (6.0 / (K + O)) ** 0.5
    weight = jax.random.uniform(kw, (O, K), dtype=jnp.float32,
                                minval=-bound, maxval=bound)
    weight_t = weight.T                     # (K, O) for x @ W^T
    bias = jnp.zeros((O,), dtype=jnp.float32)

    out = spiral_deblock(x, up_row, up_col, up_val, V_up,
                         indices, weight_t, bias)
    out = jax.block_until_ready(out)
    assert out.shape == (B, N, O)

    # --- references ---------------------------------------------------------
    hi = jax.lax.Precision.HIGHEST
    bf16, f32 = jnp.bfloat16, jnp.float32

    # (a) quantized reference mirroring the kernel arithmetic exactly
    #     (bf16 operands, f32 accumulation, bf16 re-cast of the pooled gather).
    U_ref = jnp.zeros((V_up, V_in), f32).at[up_row, up_col].add(up_val)
    U_q = U_ref.astype(bf16).astype(f32)
    x_q = x.astype(bf16).astype(f32)
    G_ref = jnp.take(U_q, indices, axis=0)                            # (N, S, V_in)
    g_q = jnp.einsum('nsv,bvc->bnsc', G_ref, x_q, precision=hi)
    g_q = g_q.astype(bf16).astype(f32)
    W_q = weight_t.reshape(S, C, O).astype(bf16).astype(f32)
    ref_q = jnp.maximum(
        jnp.einsum('bnsc,sco->bno', g_q, W_q, precision=hi) + bias[None, None, :],
        0.0)
    assert jnp.allclose(out, ref_q, atol=2e-3, rtol=2e-3), (
        float(jnp.max(jnp.abs(out - ref_q))))

    # (b) loose check against the full-f32 torch module semantics
    #     (scatter-add Pool + index_select gather + Linear + ReLU).
    pooled_ref = pool(x, up_row, up_col, up_val, V_up)
    xg_ref = jnp.take(pooled_ref, indices.reshape(-1), axis=1).reshape(B, N, K)
    ref_f32 = jnp.maximum(
        jnp.dot(xg_ref, weight_t, precision=hi) + bias[None, None, :], 0.0)
    assert jnp.allclose(out, ref_f32, atol=5e-2, rtol=5e-2), (
        float(jnp.max(jnp.abs(out - ref_f32))))

    print("KERNEL_OK")
</pallas_src>

<mosaic_0001>
module attributes {stable_mosaic.version = 11 : i64} {
  func.func @_spiral_deblock_kernel(%arg0: i32, %arg1: i32, %arg2: memref<4x16x16xbf16, #tpu.memory_space<vmem>>, %arg3: memref<1x16x8xbf16, #tpu.memory_space<vmem>>, %arg4: memref<4x8x128xbf16, #tpu.memory_space<vmem>>, %arg5: memref<1x128xf32, #tpu.memory_space<vmem>>, %arg6: memref<1x16x128xf32, #tpu.memory_space<vmem>>) attributes {dimension_semantics = [#tpu.dimension_semantics<parallel>, #tpu.dimension_semantics<parallel>], iteration_bounds = array<i64: 1, 2>, scalar_prefetch = 0 : i64, scratch_operands = 0 : i64, tpu.core_type = #tpu.core_type<tc>, window_params = [{transform_indices = @transform_0, window_bounds = array<i64: 4, 16, 16>}, {transform_indices = @transform_1, window_bounds = array<i64: 1, 16, 8>}, {pipeline_mode = #tpu.pipeline_mode<synchronous>, transform_indices = @transform_2, window_bounds = array<i64: 4, 8, 128>}, {pipeline_mode = #tpu.pipeline_mode<synchronous>, transform_indices = @transform_3, window_bounds = array<i64: 1, 128>}, {transform_indices = @transform_4, window_bounds = array<i64: 1, 16, 128>}]} {
    %c0 = arith.constant 0 : index
    %c0_0 = arith.constant 0 : index
    %c0_1 = arith.constant 0 : index
    %0 = vector.load %arg3[%c0, %c0_0, %c0_1] : memref<1x16x8xbf16, #tpu.memory_space<vmem>>, vector<1x16x8xbf16>
    %1 = vector.shape_cast %0 : vector<1x16x8xbf16> to vector<16x8xbf16>
    %cst = arith.constant 0.000000e+00 : f32
    %2 = vector.broadcast %cst : f32 to vector<16x128xf32>
    %c0_2 = arith.constant 0 : index
    %c0_3 = arith.constant 0 : index
    %c0_4 = arith.constant 0 : index
    %3 = vector.load %arg2[%c0_2, %c0_3, %c0_4] : memref<4x16x16xbf16, #tpu.memory_space<vmem>>, vector<1x16x16xbf16>
    %4 = vector.shape_cast %3 : vector<1x16x16xbf16> to vector<16x16xbf16>
    %cst_5 = arith.constant dense<0.000000e+00> : vector<16x8xf32>
    %5 = tpu.matmul %4, %1, %cst_5 {dimension_numbers = #tpu.dot_dimension_numbers<[1], [0], [0], [1], [0, 0, 1, 1], [], []>} : vector<16x16xbf16>, vector<16x8xbf16>, vector<16x8xf32> -> vector<16x8xf32>
    %6 = arith.truncf %5 : vector<16x8xf32> to vector<16x8xbf16>
    %c0_6 = arith.constant 0 : index
    %c0_7 = arith.constant 0 : index
    %c0_8 = arith.constant 0 : index
    %7 = vector.load %arg4[%c0_6, %c0_7, %c0_8] : memref<4x8x128xbf16, #tpu.memory_space<vmem>>, vector<1x8x128xbf16>
    %8 = vector.shape_cast %7 : vector<1x8x128xbf16> to vector<8x128xbf16>
    %cst_9 = arith.constant dense<0.000000e+00> : vector<16x128xf32>
    %9 = tpu.matmul %6, %8, %cst_9 {dimension_numbers = #tpu.dot_dimension_numbers<[1], [0], [0], [1], [0, 0, 1, 1], [], []>} : vector<16x8xbf16>, vector<8x128xbf16>, vector<16x128xf32> -> vector<16x128xf32>
    %10 = arith.addf %2, %9 : vector<16x128xf32>
    %c1 = arith.constant 1 : index
    %c0_10 = arith.constant 0 : index
    %c0_11 = arith.constant 0 : index
    %11 = vector.load %arg2[%c1, %c0_10, %c0_11] : memref<4x16x16xbf16, #tpu.memory_space<vmem>>, vector<1x16x16xbf16>
    %12 = vector.shape_cast %11 : vector<1x16x16xbf16> to vector<16x16xbf16>
    %cst_12 = arith.constant dense<0.000000e+00> : vector<16x8xf32>
    %13 = tpu.matmul %12, %1, %cst_12 {dimension_numbers = #tpu.dot_dimension_numbers<[1], [0], [0], [1], [0, 0, 1, 1], [], []>} : vector<16x16xbf16>, vector<16x8xbf16>, vector<16x8xf32> -> vector<16x8xf32>
    %14 = arith.truncf %13 : vector<16x8xf32> to vector<16x8xbf16>
    %c1_13 = arith.constant 1 : index
    %c0_14 = arith.constant 0 : index
    %c0_15 = arith.constant 0 : index
    %15 = vector.load %arg4[%c1_13, %c0_14, %c0_15] : memref<4x8x128xbf16, #tpu.memory_space<vmem>>, vector<1x8x128xbf16>
    %16 = vector.shape_cast %15 : vector<1x8x128xbf16> to vector<8x128xbf16>
    %cst_16 = arith.constant dense<0.000000e+00> : vector<16x128xf32>
    %17 = tpu.matmul %14, %16, %cst_16 {dimension_numbers = #tpu.dot_dimension_numbers<[1], [0], [0], [1], [0, 0, 1, 1], [], []>} : vector<16x8xbf16>, vector<8x128xbf16>, vector<16x128xf32> -> vector<16x128xf32>
    %18 = arith.addf %10, %17 : vector<16x128xf32>
    %c2 = arith.constant 2 : index
    %c0_17 = arith.constant 0 : index
    %c0_18 = arith.constant 0 : index
    %19 = vector.load %arg2[%c2, %c0_17, %c0_18] : memref<4x16x16xbf16, #tpu.memory_space<vmem>>, vector<1x16x16xbf16>
    %20 = vector.shape_cast %19 : vector<1x16x16xbf16> to vector<16x16xbf16>
    %cst_19 = arith.constant dense<0.000000e+00> : vector<16x8xf32>
    %21 = tpu.matmul %20, %1, %cst_19 {dimension_numbers = #tpu.dot_dimension_numbers<[1], [0], [0], [1], [0, 0, 1, 1], [], []>} : vector<16x16xbf16>, vector<16x8xbf16>, vector<16x8xf32> -> vector<16x8xf32>
    %22 = arith.truncf %21 : vector<16x8xf32> to vector<16x8xbf16>
    %c2_20 = arith.constant 2 : index
    %c0_21 = arith.constant 0 : index
    %c0_22 = arith.constant 0 : index
    %23 = vector.load %arg4[%c2_20, %c0_21, %c0_22] : memref<4x8x128xbf16, #tpu.memory_space<vmem>>, vector<1x8x128xbf16>
    %24 = vector.shape_cast %23 : vector<1x8x128xbf16> to vector<8x128xbf16>
    %cst_23 = arith.constant dense<0.000000e+00> : vector<16x128xf32>
    %25 = tpu.matmul %22, %24, %cst_23 {dimension_numbers = #tpu.dot_dimension_numbers<[1], [0], [0], [1], [0, 0, 1, 1], [], []>} : vector<16x8xbf16>, vector<8x128xbf16>, vector<16x128xf32> -> vector<16x128xf32>
    %26 = arith.addf %18, %25 : vector<16x128xf32>
    %c3 = arith.constant 3 : index
    %c0_24 = arith.constant 0 : index
    %c0_25 = arith.constant 0 : index
    %27 = vector.load %arg2[%c3, %c0_24, %c0_25] : memref<4x16x16xbf16, #tpu.memory_space<vmem>>, vector<1x16x16xbf16>
    %28 = vector.shape_cast %27 : vector<1x16x16xbf16> to vector<16x16xbf16>
    %cst_26 = arith.constant dense<0.000000e+00> : vector<16x8xf32>
    %29 = tpu.matmul %28, %1, %cst_26 {dimension_numbers = #tpu.dot_dimension_numbers<[1], [0], [0], [1], [0, 0, 1, 1], [], []>} : vector<16x16xbf16>, vector<16x8xbf16>, vector<16x8xf32> -> vector<16x8xf32>
    %30 = arith.truncf %29 : vector<16x8xf32> to vector<16x8xbf16>
    %c3_27 = arith.constant 3 : index
    %c0_28 = arith.constant 0 : index
    %c0_29 = arith.constant 0 : index
    %31 = vector.load %arg4[%c3_27, %c0_28, %c0_29] : memref<4x8x128xbf16, #tpu.memory_space<vmem>>, vector<1x8x128xbf16>
    %32 = vector.shape_cast %31 : vector<1x8x128xbf16> to vector<8x128xbf16>
    %cst_30 = arith.constant dense<0.000000e+00> : vector<16x128xf32>
    %33 = tpu.matmul %30, %32, %cst_30 {dimension_numbers = #tpu.dot_dimension_numbers<[1], [0], [0], [1], [0, 0, 1, 1], [], []>} : vector<16x8xbf16>, vector<8x128xbf16>, vector<16x128xf32> -> vector<16x128xf32>
    %34 = arith.addf %26, %33 : vector<16x128xf32>
    %c0_31 = arith.constant 0 : index
    %c0_32 = arith.constant 0 : index
    %35 = vector.load %arg5[%c0_31, %c0_32] : memref<1x128xf32, #tpu.memory_space<vmem>>, vector<1x128xf32>
    %36 = vector.broadcast %35 : vector<1x128xf32> to vector<16x128xf32>
    %37 = arith.addf %34, %36 : vector<16x128xf32>
    %cst_33 = arith.constant 0.000000e+00 : f32
    %38 = vector.broadcast %cst_33 : f32 to vector<16x128xf32>
    %39 = arith.maximumf %37, %38 : vector<16x128xf32>
    %c0_34 = arith.constant 0 : index
    %c0_35 = arith.constant 0 : index
    %c0_36 = arith.constant 0 : index
    %40 = vector.load %arg6[%c0_34, %c0_35, %c0_36] : memref<1x16x128xf32, #tpu.memory_space<vmem>>, vector<1x16x128xf32>
    %41 = vector.shape_cast %40 : vector<1x16x128xf32> to vector<16x128xf32>
    %42 = vector.shape_cast %39 : vector<16x128xf32> to vector<1x16x128xf32>
    tpu.vector_store %arg6[%c0_34, %c0_35, %c0_36], %42 {strides = array<i32>} : memref<1x16x128xf32, #tpu.memory_space<vmem>>, vector<1x16x128xf32>,
    return
  }
  func.func @transform_0(%arg0: i32, %arg1: i32) -> (i32, i32, i32) {
    %c0_i32 = arith.constant 0 : i32
    %c0_i32_0 = arith.constant 0 : i32
    %c0_i32_1 = arith.constant 0 : i32
    return %c0_i32, %arg0, %c0_i32_0 : i32, i32, i32
  }
  func.func @transform_1(%arg0: i32, %arg1: i32) -> (i32, i32, i32) {
    %c0_i32 = arith.constant 0 : i32
    %c0_i32_0 = arith.constant 0 : i32
    %c0_i32_1 = arith.constant 0 : i32
    return %arg1, %c0_i32, %c0_i32_0 : i32, i32, i32
  }
  func.func @transform_2(%arg0: i32, %arg1: i32) -> (i32, i32, i32) {
    %c0_i32 = arith.constant 0 : i32
    %c0_i32_0 = arith.constant 0 : i32
    %c0_i32_1 = arith.constant 0 : i32
    %c0_i32_2 = arith.constant 0 : i32
    return %c0_i32, %c0_i32_0, %c0_i32_1 : i32, i32, i32
  }
  func.func @transform_3(%arg0: i32, %arg1: i32) -> (i32, i32) {
    %c0_i32 = arith.constant 0 : i32
    %c0_i32_0 = arith.constant 0 : i32
    %c0_i32_1 = arith.constant 0 : i32
    return %c0_i32, %c0_i32_0 : i32, i32
  }
  func.func @transform_4(%arg0: i32, %arg1: i32) -> (i32, i32, i32) {
    %c0_i32 = arith.constant 0 : i32
    %c0_i32_0 = arith.constant 0 : i32
    return %arg1, %arg0, %c0_i32 : i32, i32, i32
  }
}

</mosaic_0001>

<llo_original>
// kernel: tpu_custom_call.1
$region0: #{tpu_custom_call.1}
  #allocation0 [shape = 'u32[]', space=smem, size = 0x4, offset = 0x4, fixed_abs, tag = 'smem constant byte address 0x4 - core index']
  #allocation1 [shape = 'u32[144,128]{1,0:T(1,128)}', space=vmem, size = 0x12000, scoped, tag = 'internal scratch']
  %s0 = inlined_call_operand.hbm [shape: bf16[4,16,16], index: 0, kind: input, shape index: {}]
  %s1 = inlined_call_operand.vmem [shape: bf16[2,16,8], index: 1, kind: input, shape index: {}]
  %s2 = inlined_call_operand.vmem [shape: bf16[4,8,128], index: 2, kind: input, shape index: {}]
  %s3 = inlined_call_operand.vmem [shape: f32[1,128], index: 3, kind: input, shape index: {}]
  %s4 = inlined_call_operand.hbm [shape: f32[2,16,128], index: 4, kind: output, shape index: {}]
  %s5 = sld [smem:[#allocation0]]
  $region53: #{tpu_custom_call.1} parent=0
    _
  %s7 = ssub.s32 1, %s5
  %s8 = scalar_select 0, %s7, %s5
  $region1: #{tpu_custom_call.1} parent=0
    #allocation2 [shape = 'u8[16384]{0}', space=vmem, size = 0x4000, scoped, tag = 'input window, operand 0, single buffered']
    #allocation3 [shape = 's32[2]{0}', space=sflag, size = 0x8, scoped, tag = 'scoped memory for tpu_custom_call.1']
    #allocation4 [shape = 's32[2]{0}', space=sflag, size = 0x8, scoped, tag = 'scoped memory for tpu_custom_call.1']
    #allocation5 [shape = 'u8[16384]{0}', space=vmem, size = 0x4000, scoped, tag = 'output window, operand 0']
    %9 = vsyncpa [#allocation3], 0
    %10 = vsyncpa [#allocation4], 0
    %s11 = scalar_lea.sflag [#allocation4], 1
    %12 = vsyncpa %s11, 0
    loop: start=0, step=1, limit=4
    $region2: #{tpu_custom_call.1} parent=1 // loop_pre_header
      _
    $region3: #{tpu_custom_call.1} parent=1 // loop_header
      %s14 = sphi 0, %s18
      %p15 = scmp.ge.s32.totalorder %s14, 4
      %s21 = sphi 0, %s33
      %s22 = sphi 0, %s29
      %s23 = sphi 0, %s21
      %s24 = sphi 0, %s22
      %s25 = sphi 0, %s23
      %s26 = sphi 0, %s24
      %s36 = sphi 0, %s38
      %s39 = sphi 0, %s36
      %s40 = sphi 0, %s39
      %s56 = sphi 0, %s40
      %s62 = sphi 0, %s64
      %s65 = sphi 0, %s62
      %s66 = sphi 0, %s65
      %s82 = sphi 0, %s66
      %s86 = sphi 0, %s86
      %s88 = sphi 0, %s86
      %s89 = sphi 0, %s88
      %s103 = sphi 0, %s89
      %s107 = sphi 0, %s107
      %s109 = sphi 0, %s107
      %s110 = sphi 0, %s109
      %s124 = sphi 0, %s110
      %s132 = sphi 0, %s134
      %s135 = sphi 0, %s132
      %s136 = sphi 0, %s135
      %s152 = sphi 0, %s136
    $region4: #{tpu_custom_call.1} parent=1 // loop_header_branch
      %17 = sbr.rel (%p15) target = $region8
    $region5: #{tpu_custom_call.1} parent=1 // loop_body
      %s19 = ssub.s32 %s14, 1
      %s20 = ssub.s32 %s14, 2
      %s27 = sadd.s32 1, %s22
      %p28 = scmp.ge.s32.totalorder %s27, 2
      %s29 = scalar_select %p28, 0, %s27
      %s30 = sadd.s32 1, %s21
      %s31 = scalar_select %p28, %s30, %s21
      %p32 = scmp.ge.s32.totalorder %s31, 1
      %s33 = scalar_select %p32, 0, %s31
      %s34 = ssub.s32 %s21, %s33
      %p35 = scmp.eq.s32.totalorder %s34, 0
      %s37 = sadd.s32 %s36, 1
      %s38 = scalar_select %p35, %s36, %s37
      %p41 = pneg %p35
      %p42 = scmp.eq.s32.totalorder %s14, 1
      %p43 = por %p41, %p42
      %p44 = scmp.ne.s32.totalorder %s36, %s39
      %p45 = scmp.eq.s32.totalorder %s14, 0
      %p46 = por %p44, %p45
      %p47 = scmp.ne.s32.totalorder %s36, %s39
      %p48 = scmp.eq.s32.totalorder %s19, 1
      %p49 = por %p47, %p48
      %p50 = scmp.ne.s32.totalorder %s39, %s40
      %p51 = scmp.eq.s32.totalorder %s19, 0
      %p52 = por %p50, %p51
      %p53 = scmp.ne.s32.totalorder %s39, %s40
      %p54 = scmp.eq.s32.totalorder %s20, 1
      %p55 = por %p53, %p54
      %p57 = scmp.ne.s32.totalorder %s40, %s56
      %p58 = scmp.eq.s32.totalorder %s20, 0
      %p59 = por %p57, %p58
      %s60 = ssub.s32 %s22, %s29
      %p61 = scmp.eq.s32.totalorder %s60, 0
      %s63 = sadd.s32 %s62, 1
      %s64 = scalar_select %p61, %s62, %s63
      %p67 = pneg %p61
      %p68 = scmp.eq.s32.totalorder %s14, 1
      %p69 = por %p67, %p68
      %p70 = scmp.ne.s32.totalorder %s62, %s65
      %p71 = scmp.eq.s32.totalorder %s14, 0
      %p72 = por %p70, %p71
      %p73 = scmp.ne.s32.totalorder %s62, %s65
      %p74 = scmp.eq.s32.totalorder %s19, 1
      %p75 = por %p73, %p74
      %p76 = scmp.ne.s32.totalorder %s65, %s66
      %p77 = scmp.eq.s32.totalorder %s19, 0
      %p78 = por %p76, %p77
      %p79 = scmp.ne.s32.totalorder %s65, %s66
      %p80 = scmp.eq.s32.totalorder %s20, 1
      %p81 = por %p79, %p80
      %p83 = scmp.ne.s32.totalorder %s66, %s82
      %p84 = scmp.eq.s32.totalorder %s20, 0
      %p85 = por %p83, %p84
      %s87 = sadd.s32 %s86, 1
      %p90 = scmp.eq.s32.totalorder %s14, 1
      %p91 = scmp.ne.s32.totalorder %s86, %s88
      %p92 = scmp.eq.s32.totalorder %s14, 0
      %p93 = por %p91, %p92
      %p94 = scmp.ne.s32.totalorder %s86, %s88
      %p95 = scmp.eq.s32.totalorder %s19, 1
      %p96 = por %p94, %p95
      %p97 = scmp.ne.s32.totalorder %s88, %s89
      %p98 = scmp.eq.s32.totalorder %s19, 0
      %p99 = por %p97, %p98
      %p100 = scmp.ne.s32.totalorder %s88, %s89
      %p101 = scmp.eq.s32.totalorder %s20, 1
      %p102 = por %p100, %p101
      %p104 = scmp.ne.s32.totalorder %s89, %s103
      %p105 = scmp.eq.s32.totalorder %s20, 0
      %p106 = por %p104, %p105
      %s108 = sadd.s32 %s107, 1
      %p111 = scmp.eq.s32.totalorder %s14, 1
      %p112 = scmp.ne.s32.totalorder %s107, %s109
      %p113 = scmp.eq.s32.totalorder %s14, 0
      %p114 = por %p112, %p113
      %p115 = scmp.ne.s32.totalorder %s107, %s109
      %p116 = scmp.eq.s32.totalorder %s19, 1
      %p117 = por %p115, %p116
      %p118 = scmp.ne.s32.totalorder %s109, %s110
      %p119 = scmp.eq.s32.totalorder %s19, 0
      %p120 = por %p118, %p119
      %p121 = scmp.ne.s32.totalorder %s109, %s110
      %p122 = scmp.eq.s32.totalorder %s20, 1
      %p123 = por %p121, %p122
      %p125 = scmp.ne.s32.totalorder %s110, %s124
      %p126 = scmp.eq.s32.totalorder %s20, 0
      %p127 = por %p125, %p126
      %s128 = ssub.s32 %s22, %s29
      %s129 = ssub.s32 %s21, %s33
      %s130 = sor.u32 %s128, %s129
      %p131 = scmp.eq.s32.totalorder %s130, 0
      %s133 = sadd.s32 %s132, 1
      %s134 = scalar_select %p131, %s132, %s133
      %p137 = pneg %p131
      %p138 = scmp.eq.s32.totalorder %s14, 1
      %p139 = por %p137, %p138
      %p140 = scmp.ne.s32.totalorder %s132, %s135
      %p141 = scmp.eq.s32.totalorder %s14, 0
      %p142 = por %p140, %p141
      %p143 = scmp.ne.s32.totalorder %s132, %s135
      %p144 = scmp.eq.s32.totalorder %s19, 1
      %p145 = por %p143, %p144
      %p146 = scmp.ne.s32.totalorder %s135, %s136
      %p147 = scmp.eq.s32.totalorder %s19, 0
      %p148 = por %p146, %p147
      %p149 = scmp.ne.s32.totalorder %s135, %s136
      %p150 = scmp.eq.s32.totalorder %s20, 1
      %p151 = por %p149, %p150
      %p153 = scmp.ne.s32.totalorder %s136, %s152
      %p154 = scmp.eq.s32.totalorder %s20, 0
      %p155 = por %p153, %p154
      %p156 = scmp.le.s32.totalorder 1, %s14
      %p157 = scmp.lt.s32.totalorder %s14, 3
      %p158 = pnand %p156, %p157
      %p159 = pneg %p158
      // Predicated region
      $region9: #{tpu_custom_call.1} parent=5 // pred_check
        _
      $region10: #{tpu_custom_call.1} parent=5 // pred_check_branch
        %161 = sbr.rel (%p158) target = $region12
      $region11: #{tpu_custom_call.1} parent=5 // pred_region
        %s162 = ssub.s32 %s14, 1
        // Predicated region
        $region13: #{tpu_custom_call.1} parent=11 // pred_check
          %p163 = pneg %p52
        $region14: #{tpu_custom_call.1} parent=11 // pred_check_branch
          %165 = sbr.rel (%p163) target = $region16
        $region15: #{tpu_custom_call.1} parent=11 // pred_region
          %s166 = smul.u32 2, %s23
          %s168 = ssub.s32 512, 512
          %169 = vsyncadd [#allocation3], %s168
          %s170 = smul.addr %s166, 64
          %s171 = scalar_lea.hbm %s0, %s170
          %s172 = sshll.u32 [#allocation2], 4
          %s173 = int_to_ptr.vmem [resolvable:$true] %s172
          %178 = dma.hbm_to_vmem [thread:$0]  %s171, 512, %s173, [#allocation3], 64, 64, 4
        $region16: #{tpu_custom_call.1} parent=11 // pred_fallthru
          _
        // Predicated region
        $region17: #{tpu_custom_call.1} parent=11 // pred_check
          %p179 = pneg %p99
        $region18: #{tpu_custom_call.1} parent=11 // pred_check_branch
          %181 = sbr.rel (%p179) target = $region20
        $region19: #{tpu_custom_call.1} parent=11 // pred_region
          _
        $region20: #{tpu_custom_call.1} parent=11 // pred_fallthru
          _
        // Predicated region
        $region21: #{tpu_custom_call.1} parent=11 // pred_check
          %p182 = pneg %p120
        $region22: #{tpu_custom_call.1} parent=11 // pred_check_branch
          %184 = sbr.rel (%p182) target = $region24
        $region23: #{tpu_custom_call.1} parent=11 // pred_region
          _
        $region24: #{tpu_custom_call.1} parent=11 // pred_fallthru
          _
      $region12: #{tpu_custom_call.1} parent=5 // pred_fallthru
        _
      %p185 = scmp.lt.s32.totalorder %s14, 2
      // Predicated region
      $region25: #{tpu_custom_call.1} parent=5 // pred_check
        %p186 = pneg %p185
      $region26: #{tpu_custom_call.1} parent=5 // pred_check_branch
        %188 = sbr.rel (%p186) target = $region28
      $region27: #{tpu_custom_call.1} parent=5 // pred_region
        // Predicated region
        $region29: #{tpu_custom_call.1} parent=27 // pred_check
          %p189 = pneg %p72
        $region30: #{tpu_custom_call.1} parent=27 // pred_check_branch
          %191 = sbr.rel (%p189) target = $region32
        $region31: #{tpu_custom_call.1} parent=27 // pred_region
          %p192 = scmp.lt.s32.totalorder %s22, 1
          %s193 = scalar_select %p192, %s22, 1
          %s194 = smul.addr %s193, 2
          %s195 = smul.addr %s194, 4
          %s196 = scalar_lea.vmem %s1, %s195
        $region32: #{tpu_custom_call.1} parent=27 // pred_fallthru
          _
      $region28: #{tpu_custom_call.1} parent=5 // pred_fallthru
        _
      %p197 = scmp.le.s32.totalorder 1, %s14
      %p198 = scmp.lt.s32.totalorder %s14, 3
      %p199 = pnand %p197, %p198
      %p200 = pneg %p199
      // Predicated region
      $region33: #{tpu_custom_call.1} parent=5 // pred_check
        _
      $region34: #{tpu_custom_call.1} parent=5 // pred_check_branch
        %202 = sbr.rel (%p199) target = $region36
      $region35: #{tpu_custom_call.1} parent=5 // pred_region
        %s203 = ssub.s32 %s14, 1
        // Predicated region
        $region37: #{tpu_custom_call.1} parent=35 // pred_check
          %p204 = pneg %p52
        $region38: #{tpu_custom_call.1} parent=35 // pred_check_branch
          %206 = sbr.rel (%p204) target = $region40
        $region39: #{tpu_custom_call.1} parent=35 // pred_region
          %207 = dma.done [#allocation3], 512
        $region40: #{tpu_custom_call.1} parent=35 // pred_fallthru
          _
        %p208 = pneg %p52
        %p209 = pneg %p49
        %p210 = scmp.lt.s32.totalorder %s24, 1
        %s211 = scalar_select %p210, %s24, 1
        %s212 = smul.addr %s211, 2
        %s213 = smul.addr %s212, 4
        %s214 = scalar_lea.vmem %s1, %s213
        %p215 = pneg %p78
        %p216 = pneg %p75
        %p217 = pneg %p99
        %p218 = pneg %p96
        %p219 = pneg %p120
        %p220 = pneg %p117
        %p221 = pneg %p148
        %p222 = pneg %p145
        %s223 = sand.u32 %s135, 1
        %s224 = scalar_lea.sflag [#allocation4], %s223
        %s225 = sand.u32 %s135, 1
        %s226 = smul.addr %s225, 16
        %s227 = scalar_lea.vmem [#allocation5], %s226
        %s228 = smul.u32 2, %s23
        %p229 = scmp.lt.s32.totalorder %s24, 1
        %s230 = scalar_select %p229, %s24, 1
        %s231 = smul.addr %s230, 2
        %s232 = smul.addr %s231, 4
        %s233 = scalar_lea.vmem %s1, %s232
        %s234 = smul.u32 2, %s23
        %v236 = vld [vmem:[%s233] sm:$0xf]
        %v237 = vld [vmem:[%s233 + $0x4] sm:$0xf]
        %v238 = vld [vmem:[#allocation2] sm:$0xf]
        %v239 = vld [vmem:[#allocation2 + $0x4] sm:$0xf]
        %v242 = vunpack.c.l.b16 %v238
        %v243 = vunpack.c.l.b16 %v239
        %v244 = vpack.c.b16 %v243, %v242
        %v247 = vunpack.c.l.b16 %v236
        %v248 = vunpack.c.l.b16 %v237
        %v249 = vpack.c.b16 %v248, %v247
        %vm251 = vcmask 130048
        %v253 = vsel %vm251, %v244, 0
        %255 = vmatprep.subr.bf16.mxu0 0
        %256 = vmatpush1.bf16.msra.mxu0 %v249
        %257 = vmatprep.subr.bf16.mxu0 0
        %258 = vmatpush1.bf16.msra.mxu0 0
        %259 = vmatprep.subr.bf16.mxu0 0
        %260 = vmatpush1.bf16.msra.mxu0 0
        %261 = vmatprep.subr.bf16.mxu0 0
        %262 = vmatpush1.bf16.msra.mxu0 0
        %263 = vmatprep.subr.bf16.mxu0 0
        %264 = vmatpush1.bf16.msra.mxu0 0
        %265 = vmatprep.subr.bf16.mxu0 0
        %266 = vmatpush1.bf16.msra.mxu0 0
        %267 = vmatprep.subr.bf16.mxu0 0
        %268 = vmatpush1.bf16.msra.mxu0 0
        %269 = vmatprep.subr.bf16.mxu0 0
        %270 = vmatpush1.bf16.msra.mxu0 0
        %271 = vmatprep.subr.bf16.mxu0 0
        %272 = vmatpush1.bf16.msra.mxu0 0
        %273 = vmatprep.subr.bf16.mxu0 0
        %274 = vmatpush1.bf16.msra.mxu0 0
        %275 = vmatprep.subr.bf16.mxu0 0
        %276 = vmatpush1.bf16.msra.mxu0 0
        %277 = vmatprep.subr.bf16.mxu0 0
        %278 = vmatpush1.bf16.msra.mxu0 0
        %279 = vmatprep.subr.bf16.mxu0 0
        %280 = vmatpush1.bf16.msra.mxu0 0
        %281 = vmatprep.subr.bf16.mxu0 0
        %282 = vmatpush1.bf16.msra.mxu0 0
        %283 = vmatprep.subr.bf16.mxu0 0
        %284 = vmatpush1.bf16.msra.mxu0 0
        %285 = vmatprep.subr.bf16.mxu0 0
        %286 = vmatpush1.bf16.msra.mxu0 0
        %287 = vmatprep.mubr.bf16.mxu0 0
        %288 = vmatmul.mubr.bf16.gmra.mrb[0].mxu0 %v253
        %v289 = vpop.f32.mrb[0].mxu0
        %v290 = vadd.f32 0.0, %v289
        %v291 = vpop.f32.mrb[0].mxu0
        %v292 = vpop.f32.mrb[0].mxu0
        %v293 = vadd.f32 0.0, %v292
        %v294 = vpop.f32.mrb[0].mxu0
        %295 = vdwg.mxu0
        %v296 = vpack.c.bf16 %v293, %v290
        %v297 = vld [vmem:[%s2] sm:$0xf]
        %s298 = scalar_lea.vmem [#allocation2], 8
        %v299 = vld [vmem:[%s298] sm:$0xf]
        %v300 = vld [vmem:[%s298 + $0x4] sm:$0xf]
        %v303 = vunpack.c.l.b16 %v299
        %v304 = vunpack.c.l.b16 %v300
        %v305 = vpack.c.b16 %v304, %v303
        %v307 = vsel %vm251, %v305, 0
        %309 = vmatprep.subr.bf16.mxu0 0
        %310 = vmatpush1.bf16.msra.mxu0 %v249
        %311 = vmatprep.subr.bf16.mxu0 0
        %312 = vmatpush1.bf16.msra.mxu0 0
        %313 = vmatprep.subr.bf16.mxu0 0
        %314 = vmatpush1.bf16.msra.mxu0 0
        %315 = vmatprep.subr.bf16.mxu0 0
        %316 = vmatpush1.bf16.msra.mxu0 0
        %317 = vmatprep.subr.bf16.mxu0 0
        %318 = vmatpush1.bf16.msra.mxu0 0
        %319 = vmatprep.subr.bf16.mxu0 0
        %320 = vmatpush1.bf16.msra.mxu0 0
        %321 = vmatprep.subr.bf16.mxu0 0
        %322 = vmatpush1.bf16.msra.mxu0 0
        %323 = vmatprep.subr.bf16.mxu0 0
        %324 = vmatpush1.bf16.msra.mxu0 0
        %325 = vmatprep.subr.bf16.mxu0 0
        %326 = vmatpush1.bf16.msra.mxu0 0
        %327 = vmatprep.subr.bf16.mxu0 0
        %328 = vmatpush1.bf16.msra.mxu0 0
        %329 = vmatprep.subr.bf16.mxu0 0
        %330 = vmatpush1.bf16.msra.mxu0 0
        %331 = vmatprep.subr.bf16.mxu0 0
        %332 = vmatpush1.bf16.msra.mxu0 0
        %333 = vmatprep.subr.bf16.mxu0 0
        %334 = vmatpush1.bf16.msra.mxu0 0
        %335 = vmatprep.subr.bf16.mxu0 0
        %336 = vmatpush1.bf16.msra.mxu0 0
        %337 = vmatprep.subr.bf16.mxu0 0
        %338 = vmatpush1.bf16.msra.mxu0 0
        %339 = vmatprep.subr.bf16.mxu0 0
        %340 = vmatpush1.bf16.msra.mxu0 0
        %341 = vmatprep.mubr.bf16.mxu0 0
        %342 = vmatmul.mubr.bf16.gmra.mrb[0].mxu0 %v307
        %v343 = vpop.f32.mrb[0].mxu0
        %v344 = vadd.f32 0.0, %v343
        %v345 = vpop.f32.mrb[0].mxu0
        %v346 = vpop.f32.mrb[0].mxu0
        %v347 = vadd.f32 0.0, %v346
        %v348 = vpop.f32.mrb[0].mxu0
        %349 = vdwg.mxu0
        %v350 = vpack.c.bf16 %v347, %v344
        %s351 = scalar_lea.vmem %s2, 4
        %v352 = vld [vmem:[%s351] sm:$0xf]
        %vm353 = vcmask 64512
        %v355 = vsel %vm353, %v350, 0
        %vm357 = vcmask 1043456
        %v359 = vsel %vm357, %v352, 0
        %361 = vmatprep.subr.bf16.mxu0 0
        %362 = vmatpush1.bf16.msra.mxu0 %v359
        %363 = vmatprep.subr.bf16.mxu0 0
        %364 = vmatpush1.bf16.msra.mxu0 0
        %365 = vmatprep.subr.bf16.mxu0 0
        %366 = vmatpush1.bf16.msra.mxu0 0
        %367 = vmatprep.subr.bf16.mxu0 0
        %368 = vmatpush1.bf16.msra.mxu0 0
        %369 = vmatprep.subr.bf16.mxu0 0
        %370 = vmatpush1.bf16.msra.mxu0 0
        %371 = vmatprep.subr.bf16.mxu0 0
        %372 = vmatpush1.bf16.msra.mxu0 0
        %373 = vmatprep.subr.bf16.mxu0 0
        %374 = vmatpush1.bf16.msra.mxu0 0
        %375 = vmatprep.subr.bf16.mxu0 0
        %376 = vmatpush1.bf16.msra.mxu0 0
        %377 = vmatprep.subr.bf16.mxu0 0
        %378 = vmatpush1.bf16.msra.mxu0 0
        %379 = vmatprep.subr.bf16.mxu0 0
        %380 = vmatpush1.bf16.msra.mxu0 0
        %381 = vmatprep.subr.bf16.mxu0 0
        %382 = vmatpush1.bf16.msra.mxu0 0
        %383 = vmatprep.subr.bf16.mxu0 0
        %384 = vmatpush1.bf16.msra.mxu0 0
        %385 = vmatprep.subr.bf16.mxu0 0
        %386 = vmatpush1.bf16.msra.mxu0 0
        %387 = vmatprep.subr.bf16.mxu0 0
        %388 = vmatpush1.bf16.msra.mxu0 0
        %389 = vmatprep.subr.bf16.mxu0 0
        %390 = vmatpush1.bf16.msra.mxu0 0
        %391 = vmatprep.subr.bf16.mxu0 0
        %392 = vmatpush1.bf16.msra.mxu0 0
        %393 = vmatprep.mubr.bf16.mxu0 0
        %394 = vmatmul.mubr.bf16.gmra.mrb[0].mxu0 %v355
        %v395 = vpop.f32.mrb[0].mxu0
        %v396 = vadd.f32 0.0, %v395
        %v397 = vpop.f32.mrb[0].mxu0
        %v398 = vpop.f32.mrb[0].mxu0
        %v399 = vadd.f32 0.0, %v398
        %v400 = vpop.f32.mrb[0].mxu0
        %401 = vdwg.mxu0
        %v403 = vsel %vm353, %v296, 0
        %v406 = vsel %vm357, %v297, 0
        %408 = vmatprep.subr.bf16.mxu0 0
        %409 = vmatpush1.bf16.msra.mxu0 %v406
        %410 = vmatprep.subr.bf16.mxu0 0
        %411 = vmatpush1.bf16.msra.mxu0 0
        %412 = vmatprep.subr.bf16.mxu0 0
        %413 = vmatpush1.bf16.msra.mxu0 0
        %414 = vmatprep.subr.bf16.mxu0 0
        %415 = vmatpush1.bf16.msra.mxu0 0
        %416 = vmatprep.subr.bf16.mxu0 0
        %417 = vmatpush1.bf16.msra.mxu0 0
        %418 = vmatprep.subr.bf16.mxu0 0
        %419 = vmatpush1.bf16.msra.mxu0 0
        %420 = vmatprep.subr.bf16.mxu0 0
        %421 = vmatpush1.bf16.msra.mxu0 0
        %422 = vmatprep.subr.bf16.mxu0 0
        %423 = vmatpush1.bf16.msra.mxu0 0
        %424 = vmatprep.subr.bf16.mxu0 0
        %425 = vmatpush1.bf16.msra.mxu0 0
        %426 = vmatprep.subr.bf16.mxu0 0
        %427 = vmatpush1.bf16.msra.mxu0 0
        %428 = vmatprep.subr.bf16.mxu0 0
        %429 = vmatpush1.bf16.msra.mxu0 0
        %430 = vmatprep.subr.bf16.mxu0 0
        %431 = vmatpush1.bf16.msra.mxu0 0
        %432 = vmatprep.subr.bf16.mxu0 0
        %433 = vmatpush1.bf16.msra.mxu0 0
        %434 = vmatprep.subr.bf16.mxu0 0
        %435 = vmatpush1.bf16.msra.mxu0 0
        %436 = vmatprep.subr.bf16.mxu0 0
        %437 = vmatpush1.bf16.msra.mxu0 0
        %438 = vmatprep.subr.bf16.mxu0 0
        %439 = vmatpush1.bf16.msra.mxu0 0
        %440 = vmatprep.mubr.bf16.mxu0 0
        %441 = vmatmul.mubr.bf16.gmra.mrb[0].mxu0 %v403
        %v442 = vpop.f32.mrb[0].mxu0
        %v443 = vadd.f32 %v396, %v442
        %v444 = vpop.f32.mrb[0].mxu0
        %v445 = vpop.f32.mrb[0].mxu0
        %v446 = vadd.f32 %v399, %v445
        %v447 = vpop.f32.mrb[0].mxu0
        %448 = vdwg.mxu0
        %s449 = scalar_lea.vmem [#allocation2], 16
        %v450 = vld [vmem:[%s449] sm:$0xf]
        %v451 = vld [vmem:[%s449 + $0x4] sm:$0xf]
        %v454 = vunpack.c.l.b16 %v450
        %v455 = vunpack.c.l.b16 %v451
        %v456 = vpack.c.b16 %v455, %v454
        %v458 = vsel %vm251, %v456, 0
        %460 = vmatprep.subr.bf16.mxu0 0
        %461 = vmatpush1.bf16.msra.mxu0 %v249
        %462 = vmatprep.subr.bf16.mxu0 0
        %463 = vmatpush1.bf16.msra.mxu0 0
        %464 = vmatprep.subr.bf16.mxu0 0
        %465 = vmatpush1.bf16.msra.mxu0 0
        %466 = vmatprep.subr.bf16.mxu0 0
        %467 = vmatpush1.bf16.msra.mxu0 0
        %468 = vmatprep.subr.bf16.mxu0 0
        %469 = vmatpush1.bf16.msra.mxu0 0
        %470 = vmatprep.subr.bf16.mxu0 0
        %471 = vmatpush1.bf16.msra.mxu0 0
        %472 = vmatprep.subr.bf16.mxu0 0
        %473 = vmatpush1.bf16.msra.mxu0 0
        %474 = vmatprep.subr.bf16.mxu0 0
        %475 = vmatpush1.bf16.msra.mxu0 0
        %476 = vmatprep.subr.bf16.mxu0 0
        %477 = vmatpush1.bf16.msra.mxu0 0
        %478 = vmatprep.subr.bf16.mxu0 0
        %479 = vmatpush1.bf16.msra.mxu0 0
        %480 = vmatprep.subr.bf16.mxu0 0
        %481 = vmatpush1.bf16.msra.mxu0 0
        %482 = vmatprep.subr.bf16.mxu0 0
        %483 = vmatpush1.bf16.msra.mxu0 0
        %484 = vmatprep.subr.bf16.mxu0 0
        %485 = vmatpush1.bf16.msra.mxu0 0
        %486 = vmatprep.subr.bf16.mxu0 0
        %487 = vmatpush1.bf16.msra.mxu0 0
        %488 = vmatprep.subr.bf16.mxu0 0
        %489 = vmatpush1.bf16.msra.mxu0 0
        %490 = vmatprep.subr.bf16.mxu0 0
        %491 = vmatpush1.bf16.msra.mxu0 0
        %492 = vmatprep.mubr.bf16.mxu0 0
        %493 = vmatmul.mubr.bf16.gmra.mrb[0].mxu0 %v458
        %v494 = vpop.f32.mrb[0].mxu0
        %v495 = vadd.f32 0.0, %v494
        %v496 = vpop.f32.mrb[0].mxu0
        %v497 = vpop.f32.mrb[0].mxu0
        %v498 = vadd.f32 0.0, %v497
        %v499 = vpop.f32.mrb[0].mxu0
        %500 = vdwg.mxu0
        %v501 = vpack.c.bf16 %v498, %v495
        %s502 = scalar_lea.vmem %s2, 8
        %v503 = vld [vmem:[%s502] sm:$0xf]
        %v505 = vsel %vm353, %v501, 0
        %v508 = vsel %vm357, %v503, 0
        %510 = vmatprep.subr.bf16.mxu0 0
        %511 = vmatpush1.bf16.msra.mxu0 %v508
        %512 = vmatprep.subr.bf16.mxu0 0
        %513 = vmatpush1.bf16.msra.mxu0 0
        %514 = vmatprep.subr.bf16.mxu0 0
        %515 = vmatpush1.bf16.msra.mxu0 0
        %516 = vmatprep.subr.bf16.mxu0 0
        %517 = vmatpush1.bf16.msra.mxu0 0
        %518 = vmatprep.subr.bf16.mxu0 0
        %519 = vmatpush1.bf16.msra.mxu0 0
        %520 = vmatprep.subr.bf16.mxu0 0
        %521 = vmatpush1.bf16.msra.mxu0 0
        %522 = vmatprep.subr.bf16.mxu0 0
        %523 = vmatpush1.bf16.msra.mxu0 0
        %524 = vmatprep.subr.bf16.mxu0 0
        %525 = vmatpush1.bf16.msra.mxu0 0
        %526 = vmatprep.subr.bf16.mxu0 0
        %527 = vmatpush1.bf16.msra.mxu0 0
        %528 = vmatprep.subr.bf16.mxu0 0
        %529 = vmatpush1.bf16.msra.mxu0 0
        %530 = vmatprep.subr.bf16.mxu0 0
        %531 = vmatpush1.bf16.msra.mxu0 0
        %532 = vmatprep.subr.bf16.mxu0 0
        %533 = vmatpush1.bf16.msra.mxu0 0
        %534 = vmatprep.subr.bf16.mxu0 0
        %535 = vmatpush1.bf16.msra.mxu0 0
        %536 = vmatprep.subr.bf16.mxu0 0
        %537 = vmatpush1.bf16.msra.mxu0 0
        %538 = vmatprep.subr.bf16.mxu0 0
        %539 = vmatpush1.bf16.msra.mxu0 0
        %540 = vmatprep.subr.bf16.mxu0 0
        %541 = vmatpush1.bf16.msra.mxu0 0
        %542 = vmatprep.mubr.bf16.mxu0 0
        %543 = vmatmul.mubr.bf16.gmra.mrb[0].mxu0 %v505
        %v544 = vpop.f32.mrb[0].mxu0
        %v545 = vadd.f32 0.0, %v544
        %v546 = vpop.f32.mrb[0].mxu0
        %v547 = vpop.f32.mrb[0].mxu0
        %v548 = vadd.f32 0.0, %v547
        %v549 = vpop.f32.mrb[0].mxu0
        %550 = vdwg.mxu0
        %v551 = vadd.f32 %v443, %v545
        %v552 = vadd.f32 %v446, %v548
        %s553 = scalar_lea.vmem [#allocation2], 24
        %v554 = vld [vmem:[%s553] sm:$0xf]
        %v555 = vld [vmem:[%s553 + $0x4] sm:$0xf]
        %v558 = vunpack.c.l.b16 %v554
        %v559 = vunpack.c.l.b16 %v555
        %v560 = vpack.c.b16 %v559, %v558
        %v562 = vsel %vm251, %v560, 0
        %564 = vmatprep.subr.bf16.mxu0 0
        %565 = vmatpush1.bf16.msra.mxu0 %v249
        %566 = vmatprep.subr.bf16.mxu0 0
        %567 = vmatpush1.bf16.msra.mxu0 0
        %568 = vmatprep.subr.bf16.mxu0 0
        %569 = vmatpush1.bf16.msra.mxu0 0
        %570 = vmatprep.subr.bf16.mxu0 0
        %571 = vmatpush1.bf16.msra.mxu0 0
        %572 = vmatprep.subr.bf16.mxu0 0
        %573 = vmatpush1.bf16.msra.mxu0 0
        %574 = vmatprep.subr.bf16.mxu0 0
        %575 = vmatpush1.bf16.msra.mxu0 0
        %576 = vmatprep.subr.bf16.mxu0 0
        %577 = vmatpush1.bf16.msra.mxu0 0
        %578 = vmatprep.subr.bf16.mxu0 0
        %579 = vmatpush1.bf16.msra.mxu0 0
        %580 = vmatprep.subr.bf16.mxu0 0
        %581 = vmatpush1.bf16.msra.mxu0 0
        %582 = vmatprep.subr.bf16.mxu0 0
        %583 = vmatpush1.bf16.msra.mxu0 0
        %584 = vmatprep.subr.bf16.mxu0 0
        %585 = vmatpush1.bf16.msra.mxu0 0
        %586 = vmatprep.subr.bf16.mxu0 0
        %587 = vmatpush1.bf16.msra.mxu0 0
        %588 = vmatprep.subr.bf16.mxu0 0
        %589 = vmatpush1.bf16.msra.mxu0 0
        %590 = vmatprep.subr.bf16.mxu0 0
        %591 = vmatpush1.bf16.msra.mxu0 0
        %592 = vmatprep.subr.bf16.mxu0 0
        %593 = vmatpush1.bf16.msra.mxu0 0
        %594 = vmatprep.subr.bf16.mxu0 0
        %595 = vmatpush1.bf16.msra.mxu0 0
        %596 = vmatprep.mubr.bf16.mxu0 0
        %597 = vmatmul.mubr.bf16.gmra.mrb[0].mxu0 %v562
        %v598 = vpop.f32.mrb[0].mxu0
        %v599 = vadd.f32 0.0, %v598
        %v600 = vpop.f32.mrb[0].mxu0
        %v601 = vpop.f32.mrb[0].mxu0
        %v602 = vadd.f32 0.0, %v601
        %v603 = vpop.f32.mrb[0].mxu0
        %604 = vdwg.mxu0
        %v605 = vpack.c.bf16 %v602, %v599
        %s606 = scalar_lea.vmem %s2, 12
        %v607 = vld [vmem:[%s606] sm:$0xf]
        %v609 = vsel %vm353, %v605, 0
        %v612 = vsel %vm357, %v607, 0
        %614 = vmatprep.subr.bf16.mxu0 0
        %615 = vmatpush1.bf16.msra.mxu0 %v612
        %616 = vmatprep.subr.bf16.mxu0 0
        %617 = vmatpush1.bf16.msra.mxu0 0
        %618 = vmatprep.subr.bf16.mxu0 0
        %619 = vmatpush1.bf16.msra.mxu0 0
        %620 = vmatprep.subr.bf16.mxu0 0
        %621 = vmatpush1.bf16.msra.mxu0 0
        %622 = vmatprep.subr.bf16.mxu0 0
        %623 = vmatpush1.bf16.msra.mxu0 0
        %624 = vmatprep.subr.bf16.mxu0 0
        %625 = vmatpush1.bf16.msra.mxu0 0
        %626 = vmatprep.subr.bf16.mxu0 0
        %627 = vmatpush1.bf16.msra.mxu0 0
        %628 = vmatprep.subr.bf16.mxu0 0
        %629 = vmatpush1.bf16.msra.mxu0 0
        %630 = vmatprep.subr.bf16.mxu0 0
        %631 = vmatpush1.bf16.msra.mxu0 0
        %632 = vmatprep.subr.bf16.mxu0 0
        %633 = vmatpush1.bf16.msra.mxu0 0
        %634 = vmatprep.subr.bf16.mxu0 0
        %635 = vmatpush1.bf16.msra.mxu0 0
        %636 = vmatprep.subr.bf16.mxu0 0
        %637 = vmatpush1.bf16.msra.mxu0 0
        %638 = vmatprep.subr.bf16.mxu0 0
        %639 = vmatpush1.bf16.msra.mxu0 0
        %640 = vmatprep.subr.bf16.mxu0 0
        %641 = vmatpush1.bf16.msra.mxu0 0
        %642 = vmatprep.subr.bf16.mxu0 0
        %643 = vmatpush1.bf16.msra.mxu0 0
        %644 = vmatprep.subr.bf16.mxu0 0
        %645 = vmatpush1.bf16.msra.mxu0 0
        %646 = vmatprep.mubr.bf16.mxu0 0
        %647 = vmatmul.mubr.bf16.gmra.mrb[0].mxu0 %v609
        %v648 = vpop.f32.mrb[0].mxu0
        %v649 = vadd.f32 0.0, %v648
        %v650 = vpop.f32.mrb[0].mxu0
        %v651 = vpop.f32.mrb[0].mxu0
        %v652 = vadd.f32 0.0, %v651
        %v653 = vpop.f32.mrb[0].mxu0
        %654 = vdwg.mxu0
        %v655 = vadd.f32 %v551, %v649
        %v656 = vadd.f32 %v552, %v652
        %v657 = vld [vmem:[%s3] sm:$0x1]
        %v659 = vlaneseq
        %v660 = vshrl.u32 %v659, 7
        %v661 = vsub.s32 0, %v660
        %v662 = vrot.slane %v657, %v661
        %v664 = vadd.f32 %v655, %v662
        %v665 = vadd.f32 %v656, %v662
        %v666 = vmax.f32 %v664, 0.0
        %v667 = vmax.f32 %v665, 0.0
        %668 = vst [vmem:[%s227] sm:$0xff] %v666
        %669 = vst [vmem:[%s227 + $0x8] sm:$0xff] %v667
        %s670 = sand.u32 %s135, 1
        %s671 = scalar_lea.sflag [#allocation4], %s670
        %s672 = sand.u32 %s135, 1
        %s673 = smul.addr %s672, 16
        %s674 = scalar_lea.vmem [#allocation5], %s673
        // Predicated region
        $region41: #{tpu_custom_call.1} parent=35 // pred_check
          %p675 = pneg %p145
        $region42: #{tpu_custom_call.1} parent=35 // pred_check_branch
          %677 = sbr.rel (%p675) target = $region44
        $region43: #{tpu_custom_call.1} parent=35 // pred_region
          %s678 = smul.u32 2, %s23
          %s680 = ssub.s32 256, 256
          %681 = vsyncadd %s671, %s680
          %s682 = smul.addr %s24, 2
          %s683 = sadd.s32 %s678, %s682
          %s684 = smul.addr %s683, 128
          %s685 = scalar_lea.hbm %s4, %s684
          %s686 = sshll.u32 %s674, 4
          %s687 = int_to_ptr.vmem [resolvable:$true] %s686
          %692 = dma.vmem_to_hbm [thread:$0]  %s687, 256, %s685, %s671, 128, 128, 8
        $region44: #{tpu_custom_call.1} parent=35 // pred_fallthru
          _
      $region36: #{tpu_custom_call.1} parent=5 // pred_fallthru
        _
      %p693 = scmp.le.s32.totalorder 2, %s14
      // Predicated region
      $region45: #{tpu_custom_call.1} parent=5 // pred_check
        %p694 = pneg %p693
      $region46: #{tpu_custom_call.1} parent=5 // pred_check_branch
        %696 = sbr.rel (%p694) target = $region48
      $region47: #{tpu_custom_call.1} parent=5 // pred_region
        %s697 = ssub.s32 %s14, 2
        // Predicated region
        $region49: #{tpu_custom_call.1} parent=47 // pred_check
          %p698 = pneg %p151
        $region50: #{tpu_custom_call.1} parent=47 // pred_check_branch
          %700 = sbr.rel (%p698) target = $region52
        $region51: #{tpu_custom_call.1} parent=47 // pred_region
          %s701 = sand.u32 %s136, 1
          %s702 = scalar_lea.sflag [#allocation4], %s701
          %s703 = sand.u32 %s136, 1
          %s704 = smul.addr %s703, 16
          %s705 = scalar_lea.vmem [#allocation5], %s704
          %706 = dma.done %s702, 256
        $region52: #{tpu_custom_call.1} parent=47 // pred_fallthru
          _
      $region48: #{tpu_custom_call.1} parent=5 // pred_fallthru
        _
    $region6: #{tpu_custom_call.1} parent=1 // loop_footer
      %s18 = sadd.s32 1, %s14
    $region7: #{tpu_custom_call.1} parent=1 // loop_footer_branch
      %13 = sbr.rel target = $region3
    $region8: #{tpu_custom_call.1} parent=1 // loop_exit
      _
    %707 = vsyncpa [#allocation3], 1
    %s708 = scalar_lea.sflag [#allocation3], 1
    %709 = vsyncpa %s708, 1
    %710 = vsyncpa [#allocation4], 1
    %s711 = scalar_lea.sflag [#allocation4], 1
    %712 = vsyncpa %s711, 1

</llo_original>
